<compile_context>
chip_gen: v6e
topology: v6e:2x2x1
jax: 0.10.0
libtpu: 0.0.40
codegen_flags: <defaults>
</compile_context>

<pallas_src>
import functools

import jax
import jax.numpy as jnp
from jax.experimental import pallas as pl
from jax.experimental.pallas import tpu as pltpu


_ACC_BUDGET_BYTES = 2 * 1024 * 1024   # target size of the f32 VMEM accumulator


def _pick_row_chunk(n_rows, row_w, c_out, budget=_ACC_BUDGET_BYTES):
    """Largest divisor of n_rows whose (rows*W, C) f32 accumulator fits budget."""
    best = 1
    for rc in range(1, n_rows + 1):
        if n_rows % rc == 0 and rc * row_w * c_out * 4 <= budget:
            best = rc
    return best


def _vmem_limit_bytes(*nbytes):
    need = int(sum(nbytes)) + (8 << 20)          # + compiler headroom
    return max(32 << 20, min(need, 64 << 20))


# ----------------------------------------------------------------------------
# Kernel 1: downsampling conv (3x3, stride 2) + folded BN + LeakyReLU(0.1),
# expressed as a stride-1 conv over the space-to-depth'ed input with the two
# dw taps K-concatenated (contraction depth 8*C_in, 2 matmuls per chunk).
# ----------------------------------------------------------------------------
def _down_conv_kernel(xs_ref, w_ref, scale_ref, shift_ref, out_ref, acc_ref, *,
                      H_out, W_out, C_in8, C_out, row_chunk):
    scale = scale_ref[...]                       # (1, C_out) f32
    shift = shift_ref[...]
    n_chunks = H_out // row_chunk

    def body(i, carry):
        r0 = pl.multiple_of(i * row_chunk, row_chunk)
        for dh in range(2):                      # static: 2 taps
            slab = xs_ref[pl.ds(r0 + dh, row_chunk), :, :]   # (rc, W_out+1, 4C)
            patch = jnp.concatenate(
                [slab[:, 0:W_out, :], slab[:, 1:W_out + 1, :]], axis=-1)
            patch = patch.reshape(row_chunk * W_out, C_in8)
            contrib = jnp.dot(patch, w_ref[dh],
                              preferred_element_type=jnp.float32)
            if dh == 0:
                acc_ref[...] = contrib
            else:
                acc_ref[...] += contrib
        y = acc_ref[...] * scale + shift         # folded BN + conv bias (f32)
        y = jnp.where(y > 0, y, 0.1 * y)         # LeakyReLU(0.1)
        out_ref[pl.ds(r0, row_chunk), :, :] = (
            y.reshape(row_chunk, W_out, C_out).astype(out_ref.dtype))
        return carry

    jax.lax.fori_loop(0, n_chunks, body, 0)


def downsample_conv_bn_leaky(x_nhwc, w, scale, shift):
    """3x3 stride-2 'same' conv + folded BN + LeakyReLU.  x: (N,H,W,Cin) bf16."""
    N, H, W, C_in = x_nhwc.shape
    assert H % 2 == 0 and W % 2 == 0, "stride-2 conv assumes even H and W"
    C_out = w.shape[-1]
    H_out, W_out = H // 2, W // 2

    # The only external pad in the stage (the twin pads its h in VMEM).
    xp = jnp.pad(x_nhwc, ((0, 0), (1, 1), (1, 1), (0, 0)))
    Hs, Ws = H_out + 1, W_out + 1
    # Space-to-depth (factor 2): channel layout is (ph, pw, c).
    xs = xp.reshape(N, Hs, 2, Ws, 2, C_in)
    xs = xs.transpose(0, 1, 3, 2, 4, 5).reshape(N, Hs, Ws, 4 * C_in)

    # 3x3 stride-2 kernel -> 2 stride-1 dh taps of depth 8*C_in, contraction
    # index order (dw, ph, pw, c) to match the concat order in the kernel.
    wp = jnp.pad(w, ((0, 1), (0, 1), (0, 0), (0, 0)))          # (4,4,Cin,Cout)
    wd = wp.reshape(2, 2, 2, 2, C_in, C_out)                    # (dh,ph,dw,pw,c,o)
    wd = wd.transpose(0, 2, 1, 3, 4, 5).reshape(2, 8 * C_in, C_out)
    wd = wd.astype(jnp.bfloat16)

    scale2 = scale.reshape(1, C_out).astype(jnp.float32)
    shift2 = shift.reshape(1, C_out).astype(jnp.float32)

    row_chunk = _pick_row_chunk(H_out, W_out, C_out)
    kernel = functools.partial(
        _down_conv_kernel, H_out=H_out, W_out=W_out, C_in8=8 * C_in,
        C_out=C_out, row_chunk=row_chunk)

    blk_in = Hs * Ws * 4 * C_in * 2
    blk_out = H_out * W_out * C_out * 2
    wbytes = wd.size * 2 + (scale2.size + shift2.size) * 4
    scratch = row_chunk * W_out * C_out * 4
    vmem_limit = _vmem_limit_bytes(2 * (blk_in + blk_out), 2 * wbytes, scratch)

    return pl.pallas_call(
        kernel,
        out_shape=jax.ShapeDtypeStruct((N, H_out, W_out, C_out), jnp.bfloat16),
        grid=(N,),
        in_specs=[
            pl.BlockSpec((None, Hs, Ws, 4 * C_in), lambda n: (n, 0, 0, 0)),
            pl.BlockSpec((2, 8 * C_in, C_out), lambda n: (0, 0, 0)),
            pl.BlockSpec((1, C_out), lambda n: (0, 0)),
            pl.BlockSpec((1, C_out), lambda n: (0, 0)),
        ],
        out_specs=pl.BlockSpec((None, H_out, W_out, C_out),
                               lambda n: (n, 0, 0, 0)),
        scratch_shapes=[pltpu.VMEM((row_chunk * W_out, C_out), jnp.float32)],
        compiler_params=pltpu.CompilerParams(
            dimension_semantics=("parallel",),
            vmem_limit_bytes=vmem_limit),
    )(xs, wd, scale2, shift2)


# ----------------------------------------------------------------------------
# Kernel 2: fused darknet twin CHAIN.  For each twin t:
#   h = leaky(bn(conv1x1(x)))      (kept in a halo-padded VMEM scratch)
#   x = x + leaky(bn(conv3x3(h)))  (residual add fused)
# The running activation x lives in the output block (VMEM) across all twins;
# only one HBM read (input) and one HBM write (final output) per image.
# ----------------------------------------------------------------------------
def _twin_chain_kernel(x_ref, w1_ref, s1_ref, b1_ref, w2_ref, s2_ref, b2_ref,
                       out_ref, hpad_ref, acc_ref, *,
                       T, H, W, C, C_t, row_chunk):
    # Zero only the 1-pixel halo border (per grid step: megacore-safe); the
    # interior is fully overwritten by every twin's 1x1 stage.
    zrow = jnp.zeros((1, W + 2, C_t), hpad_ref.dtype)
    hpad_ref[0:1, :, :] = zrow
    hpad_ref[H + 1:H + 2, :, :] = zrow
    zcol = jnp.zeros((H + 2, 1, C_t), hpad_ref.dtype)
    hpad_ref[:, 0:1, :] = zcol
    hpad_ref[:, W + 1:W + 2, :] = zcol

    n_chunks = H // row_chunk

    for t in range(T):                            # static: <= 8 twins per stage
        src = x_ref if t == 0 else out_ref        # running activation (bf16)
        w1 = w1_ref[t]                            # (C, C_t)   bf16
        s1 = s1_ref[t]                            # (1, C_t)   f32
        b1 = b1_ref[t]
        s2 = s2_ref[t]                            # (1, C)     f32
        b2 = b2_ref[t]

        # ---- 1x1 conv + BN + leaky -> hpad interior (bf16) ------------------
        def conv1x1_chunk(i, carry):
            r0 = pl.multiple_of(i * row_chunk, row_chunk)
            xa = src[pl.ds(r0, row_chunk), :, :].reshape(row_chunk * W, C)
            h = jnp.dot(xa, w1, preferred_element_type=jnp.float32)
            h = h * s1 + b1
            h = jnp.where(h > 0, h, 0.1 * h)
            hpad_ref[pl.ds(r0 + 1, row_chunk), 1:1 + W, :] = (
                h.reshape(row_chunk, W, C_t).astype(hpad_ref.dtype))
            return carry

        jax.lax.fori_loop(0, n_chunks, conv1x1_chunk, 0)

        # ---- 3x3 conv (kw taps K-concatenated) + BN + leaky + residual ------
        def conv3x3_chunk(i, carry):
            r0 = pl.multiple_of(i * row_chunk, row_chunk)
            for kh in range(3):                   # static: 3 slabs per chunk
                slab = hpad_ref[pl.ds(r0 + kh, row_chunk), :, :]  # (rc,W+2,C_t)
                patch = jnp.concatenate(
                    [slab[:, kw:kw + W, :] for kw in range(3)], axis=-1)
                patch = patch.reshape(row_chunk * W, 3 * C_t)
                contrib = jnp.dot(patch, w2_ref[3 * t + kh],
                                  preferred_element_type=jnp.float32)
                if kh == 0:
                    acc_ref[...] = contrib
                else:
                    acc_ref[...] += contrib
            y = acc_ref[...] * s2 + b2
            y = jnp.where(y > 0, y, 0.1 * y)
            xa = src[pl.ds(r0, row_chunk), :, :].reshape(row_chunk * W, C)
            y = y + xa.astype(jnp.float32)        # residual add in f32
            out_ref[pl.ds(r0, row_chunk), :, :] = (
                y.reshape(row_chunk, W, C).astype(out_ref.dtype))
            return carry

        jax.lax.fori_loop(0, n_chunks, conv3x3_chunk, 0)


def twin_chain_bn_leaky(x_nhwc, twins):
    """Fused chain: repeat T times  x = x + leaky(bn(conv3x3(leaky(bn(conv1x1(x))))))."""
    N, H, W, C = x_nhwc.shape
    C_t = C // 2
    T = len(twins)

    w1_all = jnp.stack([p1["w"].reshape(C, C_t) for p1, _ in twins]
                       ).astype(jnp.bfloat16)                     # (T, C, C_t)
    s1_all = jnp.stack([p1["scale"].reshape(1, C_t) for p1, _ in twins]
                       ).astype(jnp.float32)                      # (T, 1, C_t)
    b1_all = jnp.stack([p1["shift"].reshape(1, C_t) for p1, _ in twins]
                       ).astype(jnp.float32)
    # (3,3,C_t,C) -> (3, 3*C_t, C): contraction index = kw*C_t + c  (matches the
    # kw-concat order in the kernel).  Stack twins along the leading axis.
    w2_all = jnp.concatenate(
        [p2["w"].reshape(3, 3 * C_t, C) for _, p2 in twins], axis=0
    ).astype(jnp.bfloat16)                                        # (3T, 3C_t, C)
    s2_all = jnp.stack([p2["scale"].reshape(1, C) for _, p2 in twins]
                       ).astype(jnp.float32)                      # (T, 1, C)
    b2_all = jnp.stack([p2["shift"].reshape(1, C) for _, p2 in twins]
                       ).astype(jnp.float32)

    row_chunk = _pick_row_chunk(H, W, C)
    kernel = functools.partial(
        _twin_chain_kernel, T=T, H=H, W=W, C=C, C_t=C_t, row_chunk=row_chunk)

    blk = H * W * C * 2                                            # bf16 block
    wbytes = ((w1_all.size + w2_all.size) * 2 +
              (s1_all.size + b1_all.size + s2_all.size + b2_all.size) * 4)
    scratch = (H + 2) * (W + 2) * C_t * 2 + row_chunk * W * C * 4
    vmem_limit = _vmem_limit_bytes(4 * blk, 2 * wbytes, scratch)

    return pl.pallas_call(
        kernel,
        out_shape=jax.ShapeDtypeStruct((N, H, W, C), jnp.bfloat16),
        grid=(N,),
        in_specs=[
            pl.BlockSpec((None, H, W, C), lambda n: (n, 0, 0, 0)),
            pl.BlockSpec((T, C, C_t), lambda n: (0, 0, 0)),
            pl.BlockSpec((T, 1, C_t), lambda n: (0, 0, 0)),
            pl.BlockSpec((T, 1, C_t), lambda n: (0, 0, 0)),
            pl.BlockSpec((3 * T, 3 * C_t, C), lambda n: (0, 0, 0)),
            pl.BlockSpec((T, 1, C), lambda n: (0, 0, 0)),
            pl.BlockSpec((T, 1, C), lambda n: (0, 0, 0)),
        ],
        out_specs=pl.BlockSpec((None, H, W, C), lambda n: (n, 0, 0, 0)),
        scratch_shapes=[
            pltpu.VMEM((H + 2, W + 2, C_t), jnp.bfloat16),   # halo-padded h
            pltpu.VMEM((row_chunk * W, C), jnp.float32),     # f32 accumulator
        ],
        compiler_params=pltpu.CompilerParams(
            dimension_semantics=("parallel",),
            vmem_limit_bytes=vmem_limit),
    )(x_nhwc, w1_all, s1_all, b1_all, w2_all, s2_all, b2_all)


# ----------------------------------------------------------------------------
# Parameter construction (deterministic, synthetic) with BN folding (eval mode).
# ----------------------------------------------------------------------------
def make_conv_bn_params(key, c_i, c_o, k):
    kw, kb, kg, kbe, km, kv = jax.random.split(key, 6)
    w = 0.05 * jax.random.normal(kw, (k, k, c_i, c_o), jnp.float32)   # HWIO
    b = 0.01 * jax.random.normal(kb, (c_o,), jnp.float32)
    gamma = 1.0 + 0.1 * jax.random.normal(kg, (c_o,), jnp.float32)
    beta = 0.05 * jax.random.normal(kbe, (c_o,), jnp.float32)
    mean = 0.01 * jax.random.normal(km, (c_o,), jnp.float32)
    var = 1.0 + 0.2 * jax.random.uniform(kv, (c_o,), jnp.float32)
    eps = 1e-5
    scale = gamma / jnp.sqrt(var + eps)
    shift = beta + scale * (b - mean)
    return {"w": w, "scale": scale, "shift": shift}


def init_darknet_stage(key, stage_index):
    twin_number = {1: 1, 2: 2, 3: 8, 4: 8, 5: 4}
    if stage_index not in twin_number:
        raise ValueError("fail to init darknet-53 stage: error stage index")
    c_i = 2 ** (stage_index + 4)
    c_o = 2 * c_i
    n_twins = twin_number[stage_index]
    keys = jax.random.split(key, 1 + 2 * n_twins)
    params = {"conv": make_conv_bn_params(keys[0], c_i, c_o, 3), "twins": []}
    for t in range(n_twins):
        params["twins"].append((
            make_conv_bn_params(keys[1 + 2 * t], c_o, c_o // 2, 1),
            make_conv_bn_params(keys[2 + 2 * t], c_o // 2, c_o, 3),
        ))
    return params, c_i


# ----------------------------------------------------------------------------
# Stage forward (Pallas) and pure-JAX f32 reference.
# ----------------------------------------------------------------------------
def darknet_stage_forward(x_nchw, params):
    x = jnp.transpose(x_nchw, (0, 2, 3, 1)).astype(jnp.bfloat16)  # NCHW -> NHWC
    p = params["conv"]
    x = downsample_conv_bn_leaky(x, p["w"], p["scale"], p["shift"])
    x = twin_chain_bn_leaky(x, params["twins"])   # whole twin chain fused
    return jnp.transpose(x, (0, 3, 1, 2)).astype(x_nchw.dtype)    # NHWC -> NCHW


def _ref_conv_bn_leaky(x, w, scale, shift, stride):
    k = w.shape[0]
    pad = (k - 1) // 2
    y = jax.lax.conv_general_dilated(
        x, w, (stride, stride), ((pad, pad), (pad, pad)),
        dimension_numbers=("NHWC", "HWIO", "NHWC"))
    y = y * scale[None, None, None, :] + shift[None, None, None, :]
    return jnp.where(y > 0, y, 0.1 * y)


def darknet_stage_reference(x_nchw, params):
    x = jnp.transpose(x_nchw, (0, 2, 3, 1))
    p = params["conv"]
    x = _ref_conv_bn_leaky(x, p["w"], p["scale"], p["shift"], 2)
    for p1, p2 in params["twins"]:
        h = _ref_conv_bn_leaky(x, p1["w"], p1["scale"], p1["shift"], 1)
        x = x + _ref_conv_bn_leaky(h, p2["w"], p2["scale"], p2["shift"], 1)
    return jnp.transpose(x, (0, 3, 1, 2))


if __name__ == "__main__":
    stage_index = 1                      # c_i = 32, c_o = 64, 1 twin
    key = jax.random.PRNGKey(0)
    k_param, k_x = jax.random.split(key)
    params, c_i = init_darknet_stage(k_param, stage_index)

    N, H, W = 2, 16, 16
    x = jax.random.normal(k_x, (N, c_i, H, W), jnp.float32)   # NCHW, like torch

    out = jax.block_until_ready(darknet_stage_forward(x, params))
    ref = jax.block_until_ready(darknet_stage_reference(x, params))

    assert out.shape == (N, 2 * c_i, H // 2, W // 2), out.shape
    max_err = float(jnp.max(jnp.abs(out.astype(jnp.float32) - ref)))
    ref_scale = float(jnp.max(jnp.abs(ref)))
    # bf16 activations/weights vs pure-f32 reference: ~2% of dynamic range.
    assert max_err <= 5e-2 + 2e-2 * ref_scale, (max_err, ref_scale)

    print("KERNEL_OK")
</pallas_src>

<mosaic_0001>
module attributes {stable_mosaic.version = 11 : i64} {
  func.func @_down_conv_kernel(%arg0: i32, %arg1: memref<1x9x9x128xbf16, #tpu.memory_space<vmem>>, %arg2: memref<2x256x64xbf16, #tpu.memory_space<vmem>>, %arg3: memref<1x64xf32, #tpu.memory_space<vmem>>, %arg4: memref<1x64xf32, #tpu.memory_space<vmem>>, %arg5: memref<1x8x8x64xbf16, #tpu.memory_space<vmem>>, %arg6: memref<64x64xf32, #tpu.memory_space<vmem>>) attributes {dimension_semantics = [#tpu.dimension_semantics<parallel>], iteration_bounds = array<i64: 2>, scalar_prefetch = 0 : i64, scratch_operands = 1 : i64, tpu.core_type = #tpu.core_type<tc>, window_params = [{transform_indices = @transform_0, window_bounds = array<i64: 1, 9, 9, 128>}, {pipeline_mode = #tpu.pipeline_mode<synchronous>, transform_indices = @transform_1, window_bounds = array<i64: 2, 256, 64>}, {pipeline_mode = #tpu.pipeline_mode<synchronous>, transform_indices = @transform_2, window_bounds = array<i64: 1, 64>}, {pipeline_mode = #tpu.pipeline_mode<synchronous>, transform_indices = @transform_3, window_bounds = array<i64: 1, 64>}, {transform_indices = @transform_4, window_bounds = array<i64: 1, 8, 8, 64>}]} {
    %c0 = arith.constant 0 : index
    %c0_0 = arith.constant 0 : index
    %0 = vector.load %arg3[%c0, %c0_0] : memref<1x64xf32, #tpu.memory_space<vmem>>, vector<1x64xf32>
    %c0_1 = arith.constant 0 : index
    %c0_2 = arith.constant 0 : index
    %1 = vector.load %arg4[%c0_1, %c0_2] : memref<1x64xf32, #tpu.memory_space<vmem>>, vector<1x64xf32>
    %c0_i32 = arith.constant 0 : i32
    %c8_i32 = arith.constant 8 : i32
    %2 = arith.muli %c0_i32, %c8_i32 : i32
    %3 = tpu.assume_multiple %2, 8 : i32
    %c0_i32_3 = arith.constant 0 : i32
    %4 = arith.addi %3, %c0_i32_3 : i32
    %c0_4 = arith.constant 0 : index
    %5 = arith.index_cast %4 : i32 to index
    %c0_5 = arith.constant 0 : index
    %c0_6 = arith.constant 0 : index
    %6 = vector.load %arg1[%c0_4, %5, %c0_5, %c0_6] : memref<1x9x9x128xbf16, #tpu.memory_space<vmem>>, vector<1x8x9x128xbf16>
    %7 = vector.shape_cast %6 : vector<1x8x9x128xbf16> to vector<8x9x128xbf16>
    %8 = vector.extract_strided_slice %7 {offsets = [0, 0, 0], sizes = [8, 8, 128], strides = [1, 1, 1]} : vector<8x9x128xbf16> to vector<8x8x128xbf16>
    %9 = vector.extract_strided_slice %7 {offsets = [0, 1, 0], sizes = [8, 8, 128], strides = [1, 1, 1]} : vector<8x9x128xbf16> to vector<8x8x128xbf16>
    %10 = tpu.concatenate %8, %9 in 2 : vector<8x8x128xbf16>, vector<8x8x128xbf16> -> vector<8x8x256xbf16>
    %11 = vector.shape_cast %10 : vector<8x8x256xbf16> to vector<64x256xbf16>
    %c0_7 = arith.constant 0 : index
    %c0_8 = arith.constant 0 : index
    %c0_9 = arith.constant 0 : index
    %12 = vector.load %arg2[%c0_7, %c0_8, %c0_9] : memref<2x256x64xbf16, #tpu.memory_space<vmem>>, vector<1x256x64xbf16>
    %13 = vector.shape_cast %12 : vector<1x256x64xbf16> to vector<256x64xbf16>
    %cst = arith.constant dense<0.000000e+00> : vector<64x64xf32>
    %14 = tpu.matmul %11, %13, %cst {dimension_numbers = #tpu.dot_dimension_numbers<[1], [0], [0], [1], [0, 0, 1, 1], [], []>} : vector<64x256xbf16>, vector<256x64xbf16>, vector<64x64xf32> -> vector<64x64xf32>
    %c0_10 = arith.constant 0 : index
    %c0_11 = arith.constant 0 : index
    %15 = vector.load %arg6[%c0_10, %c0_11] : memref<64x64xf32, #tpu.memory_space<vmem>>, vector<64x64xf32>
    tpu.vector_store %arg6[%c0_10, %c0_11], %14 {strides = array<i32>} : memref<64x64xf32, #tpu.memory_space<vmem>>, vector<64x64xf32>,
    %c1_i32 = arith.constant 1 : i32
    %16 = arith.addi %3, %c1_i32 : i32
    %c0_12 = arith.constant 0 : index
    %17 = arith.index_cast %16 : i32 to index
    %c0_13 = arith.constant 0 : index
    %c0_14 = arith.constant 0 : index
    %18 = vector.load %arg1[%c0_12, %17, %c0_13, %c0_14] : memref<1x9x9x128xbf16, #tpu.memory_space<vmem>>, vector<1x8x9x128xbf16>
    %19 = vector.shape_cast %18 : vector<1x8x9x128xbf16> to vector<8x9x128xbf16>
    %20 = vector.extract_strided_slice %19 {offsets = [0, 0, 0], sizes = [8, 8, 128], strides = [1, 1, 1]} : vector<8x9x128xbf16> to vector<8x8x128xbf16>
    %21 = vector.extract_strided_slice %19 {offsets = [0, 1, 0], sizes = [8, 8, 128], strides = [1, 1, 1]} : vector<8x9x128xbf16> to vector<8x8x128xbf16>
    %22 = tpu.concatenate %20, %21 in 2 : vector<8x8x128xbf16>, vector<8x8x128xbf16> -> vector<8x8x256xbf16>
    %23 = vector.shape_cast %22 : vector<8x8x256xbf16> to vector<64x256xbf16>
    %c1 = arith.constant 1 : index
    %c0_15 = arith.constant 0 : index
    %c0_16 = arith.constant 0 : index
    %24 = vector.load %arg2[%c1, %c0_15, %c0_16] : memref<2x256x64xbf16, #tpu.memory_space<vmem>>, vector<1x256x64xbf16>
    %25 = vector.shape_cast %24 : vector<1x256x64xbf16> to vector<256x64xbf16>
    %cst_17 = arith.constant dense<0.000000e+00> : vector<64x64xf32>
    %26 = tpu.matmul %23, %25, %cst_17 {dimension_numbers = #tpu.dot_dimension_numbers<[1], [0], [0], [1], [0, 0, 1, 1], [], []>} : vector<64x256xbf16>, vector<256x64xbf16>, vector<64x64xf32> -> vector<64x64xf32>
    %c0_18 = arith.constant 0 : index
    %c0_19 = arith.constant 0 : index
    %27 = vector.load %arg6[%c0_18, %c0_19] : memref<64x64xf32, #tpu.memory_space<vmem>>, vector<64x64xf32>
    %28 = arith.addf %27, %26 : vector<64x64xf32>
    %c0_20 = arith.constant 0 : index
    %c0_21 = arith.constant 0 : index
    %29 = vector.load %arg6[%c0_20, %c0_21] : memref<64x64xf32, #tpu.memory_space<vmem>>, vector<64x64xf32>
    tpu.vector_store %arg6[%c0_20, %c0_21], %28 {strides = array<i32>} : memref<64x64xf32, #tpu.memory_space<vmem>>, vector<64x64xf32>,
    %c0_22 = arith.constant 0 : index
    %c0_23 = arith.constant 0 : index
    %30 = vector.load %arg6[%c0_22, %c0_23] : memref<64x64xf32, #tpu.memory_space<vmem>>, vector<64x64xf32>
    %31 = vector.broadcast %0 : vector<1x64xf32> to vector<64x64xf32>
    %32 = arith.mulf %30, %31 : vector<64x64xf32>
    %33 = vector.broadcast %1 : vector<1x64xf32> to vector<64x64xf32>
    %34 = arith.addf %32, %33 : vector<64x64xf32>
    %cst_24 = arith.constant 0.000000e+00 : f32
    %35 = vector.broadcast %cst_24 : f32 to vector<64x64xf32>
    %36 = arith.cmpf ogt, %34, %35 : vector<64x64xf32>
    %cst_25 = arith.constant 1.000000e-01 : f32
    %37 = vector.broadcast %cst_25 : f32 to vector<64x64xf32>
    %38 = arith.mulf %37, %34 : vector<64x64xf32>
    %39 = arith.select %36, %34, %38 : vector<64x64xi1>, vector<64x64xf32>
    %40 = vector.shape_cast %39 : vector<64x64xf32> to vector<8x8x64xf32>
    %41 = arith.truncf %40 : vector<8x8x64xf32> to vector<8x8x64xbf16>
    %c0_26 = arith.constant 0 : index
    %42 = arith.index_cast %3 : i32 to index
    %c0_27 = arith.constant 0 : index
    %c0_28 = arith.constant 0 : index
    %43 = vector.load %arg5[%c0_26, %42, %c0_27, %c0_28] : memref<1x8x8x64xbf16, #tpu.memory_space<vmem>>, vector<1x8x8x64xbf16>
    %44 = vector.shape_cast %43 : vector<1x8x8x64xbf16> to vector<8x8x64xbf16>
    %45 = vector.shape_cast %41 : vector<8x8x64xbf16> to vector<1x8x8x64xbf16>
    tpu.vector_store %arg5[%c0_26, %42, %c0_27, %c0_28], %45 {strides = array<i32>} : memref<1x8x8x64xbf16, #tpu.memory_space<vmem>>, vector<1x8x8x64xbf16>,
    %c1_i32_29 = arith.constant 1 : i32
    return
  }
  func.func @transform_0(%arg0: i32) -> (i32, i32, i32, i32) {
    %c0_i32 = arith.constant 0 : i32
    %c0_i32_0 = arith.constant 0 : i32
    %c0_i32_1 = arith.constant 0 : i32
    %c0_i32_2 = arith.constant 0 : i32
    return %arg0, %c0_i32, %c0_i32_0, %c0_i32_1 : i32, i32, i32, i32
  }
  func.func @transform_1(%arg0: i32) -> (i32, i32, i32) {
    %c0_i32 = arith.constant 0 : i32
    %c0_i32_0 = arith.constant 0 : i32
    %c0_i32_1 = arith.constant 0 : i32
    %c0_i32_2 = arith.constant 0 : i32
    return %c0_i32, %c0_i32_0, %c0_i32_1 : i32, i32, i32
  }
  func.func @transform_2(%arg0: i32) -> (i32, i32) {
    %c0_i32 = arith.constant 0 : i32
    %c0_i32_0 = arith.constant 0 : i32
    %c0_i32_1 = arith.constant 0 : i32
    return %c0_i32, %c0_i32_0 : i32, i32
  }
  func.func @transform_3(%arg0: i32) -> (i32, i32) {
    %c0_i32 = arith.constant 0 : i32
    %c0_i32_0 = arith.constant 0 : i32
    %c0_i32_1 = arith.constant 0 : i32
    return %c0_i32, %c0_i32_0 : i32, i32
  }
  func.func @transform_4(%arg0: i32) -> (i32, i32, i32, i32) {
    %c0_i32 = arith.constant 0 : i32
    %c0_i32_0 = arith.constant 0 : i32
    %c0_i32_1 = arith.constant 0 : i32
    %c0_i32_2 = arith.constant 0 : i32
    return %arg0, %c0_i32, %c0_i32_0, %c0_i32_1 : i32, i32, i32, i32
  }
}

</mosaic_0001>

<llo_original>
// kernel: tpu_custom_call.1
$region0: #{tpu_custom_call.1}
  #allocation0 [shape = 'u32[]', space=smem, size = 0x4, offset = 0x4, fixed_abs, tag = 'smem constant byte address 0x4 - core index']
  #allocation1 [shape = 'u32[144,128]{1,0:T(1,128)}', space=vmem, size = 0x12000, scoped, tag = 'internal scratch']
  #allocation2 [shape = 'f32[64,64]{1,0:T(8,128)}', space=vmem, size = 0x8000, scoped, tag = 'scratch operand']
  %s0 = inlined_call_operand.vmem [shape: bf16[2,9,9,128], index: 0, kind: input, shape index: {}]
  %s1 = inlined_call_operand.vmem [shape: bf16[2,256,64], index: 1, kind: input, shape index: {}]
  %s2 = inlined_call_operand.vmem [shape: f32[1,64], index: 2, kind: input, shape index: {}]
  %s3 = inlined_call_operand.vmem [shape: f32[1,64], index: 3, kind: input, shape index: {}]
  %s4 = inlined_call_operand.hbm [shape: bf16[2,8,8,64], index: 4, kind: output, shape index: {}]
  %s5 = sld [smem:[#allocation0]]
  $region49: #{tpu_custom_call.1} parent=0
    _
  %s7 = ssub.s32 1, %s5
  %s8 = scalar_select 0, %s7, %s5
  $region1: #{tpu_custom_call.1} parent=0
    #allocation3 [shape = 'u8[32768]{0}', space=vmem, size = 0x8000, scoped, tag = 'output window, operand 0']
    #allocation4 [shape = 's32[2]{0}', space=sflag, size = 0x8, scoped, tag = 'scoped memory for tpu_custom_call.1']
    %9 = vsyncpa [#allocation4], 0
    %s10 = scalar_lea.sflag [#allocation4], 1
    %11 = vsyncpa %s10, 0
    loop: start=0, step=1, limit=4
    $region2: #{tpu_custom_call.1} parent=1 // loop_pre_header
      _
    $region3: #{tpu_custom_call.1} parent=1 // loop_header
      %s13 = sphi 0, %s17
      %p14 = scmp.ge.s32.totalorder %s13, 4
      %s23 = sphi 0, %s25
      %s26 = sphi 0, %s23
      %s27 = sphi 0, %s26
      %s43 = sphi 0, %s27
      %s47 = sphi 0, %s47
      %s49 = sphi 0, %s47
      %s50 = sphi 0, %s49
      %s64 = sphi 0, %s50
      %s68 = sphi 0, %s68
      %s70 = sphi 0, %s68
      %s71 = sphi 0, %s70
      %s85 = sphi 0, %s71
      %s89 = sphi 0, %s89
      %s91 = sphi 0, %s89
      %s92 = sphi 0, %s91
      %s106 = sphi 0, %s92
      %s112 = sphi 0, %s114
      %s115 = sphi 0, %s112
      %s116 = sphi 0, %s115
      %s132 = sphi 0, %s116
    $region4: #{tpu_custom_call.1} parent=1 // loop_header_branch
      %16 = sbr.rel (%p14) target = $region8
    $region5: #{tpu_custom_call.1} parent=1 // loop_body
      %s18 = ssub.s32 %s13, 1
      %s19 = ssub.s32 %s13, 2
      %s20 = sadd.s32 %s13, 1
      %s21 = ssub.s32 %s13, %s20
      %p22 = scmp.eq.s32.totalorder %s21, 0
      %s24 = sadd.s32 %s23, 1
      %s25 = scalar_select %p22, %s23, %s24
      %p28 = pneg %p22
      %p29 = scmp.eq.s32.totalorder %s13, 1
      %p30 = por %p28, %p29
      %p31 = scmp.ne.s32.totalorder %s23, %s26
      %p32 = scmp.eq.s32.totalorder %s13, 0
      %p33 = por %p31, %p32
      %p34 = scmp.ne.s32.totalorder %s23, %s26
      %p35 = scmp.eq.s32.totalorder %s18, 1
      %p36 = por %p34, %p35
      %p37 = scmp.ne.s32.totalorder %s26, %s27
      %p38 = scmp.eq.s32.totalorder %s18, 0
      %p39 = por %p37, %p38
      %p40 = scmp.ne.s32.totalorder %s26, %s27
      %p41 = scmp.eq.s32.totalorder %s19, 1
      %p42 = por %p40, %p41
      %p44 = scmp.ne.s32.totalorder %s27, %s43
      %p45 = scmp.eq.s32.totalorder %s19, 0
      %p46 = por %p44, %p45
      %s48 = sadd.s32 %s47, 1
      %p51 = scmp.eq.s32.totalorder %s13, 1
      %p52 = scmp.ne.s32.totalorder %s47, %s49
      %p53 = scmp.eq.s32.totalorder %s13, 0
      %p54 = por %p52, %p53
      %p55 = scmp.ne.s32.totalorder %s47, %s49
      %p56 = scmp.eq.s32.totalorder %s18, 1
      %p57 = por %p55, %p56
      %p58 = scmp.ne.s32.totalorder %s49, %s50
      %p59 = scmp.eq.s32.totalorder %s18, 0
      %p60 = por %p58, %p59
      %p61 = scmp.ne.s32.totalorder %s49, %s50
      %p62 = scmp.eq.s32.totalorder %s19, 1
      %p63 = por %p61, %p62
      %p65 = scmp.ne.s32.totalorder %s50, %s64
      %p66 = scmp.eq.s32.totalorder %s19, 0
      %p67 = por %p65, %p66
      %s69 = sadd.s32 %s68, 1
      %p72 = scmp.eq.s32.totalorder %s13, 1
      %p73 = scmp.ne.s32.totalorder %s68, %s70
      %p74 = scmp.eq.s32.totalorder %s13, 0
      %p75 = por %p73, %p74
      %p76 = scmp.ne.s32.totalorder %s68, %s70
      %p77 = scmp.eq.s32.totalorder %s18, 1
      %p78 = por %p76, %p77
      %p79 = scmp.ne.s32.totalorder %s70, %s71
      %p80 = scmp.eq.s32.totalorder %s18, 0
      %p81 = por %p79, %p80
      %p82 = scmp.ne.s32.totalorder %s70, %s71
      %p83 = scmp.eq.s32.totalorder %s19, 1
      %p84 = por %p82, %p83
      %p86 = scmp.ne.s32.totalorder %s71, %s85
      %p87 = scmp.eq.s32.totalorder %s19, 0
      %p88 = por %p86, %p87
      %s90 = sadd.s32 %s89, 1
      %p93 = scmp.eq.s32.totalorder %s13, 1
      %p94 = scmp.ne.s32.totalorder %s89, %s91
      %p95 = scmp.eq.s32.totalorder %s13, 0
      %p96 = por %p94, %p95
      %p97 = scmp.ne.s32.totalorder %s89, %s91
      %p98 = scmp.eq.s32.totalorder %s18, 1
      %p99 = por %p97, %p98
      %p100 = scmp.ne.s32.totalorder %s91, %s92
      %p101 = scmp.eq.s32.totalorder %s18, 0
      %p102 = por %p100, %p101
      %p103 = scmp.ne.s32.totalorder %s91, %s92
      %p104 = scmp.eq.s32.totalorder %s19, 1
      %p105 = por %p103, %p104
      %p107 = scmp.ne.s32.totalorder %s92, %s106
      %p108 = scmp.eq.s32.totalorder %s19, 0
      %p109 = por %p107, %p108
      %s110 = ssub.s32 %s13, %s20
      %p111 = scmp.eq.s32.totalorder %s110, 0
      %s113 = sadd.s32 %s112, 1
      %s114 = scalar_select %p111, %s112, %s113
      %p117 = pneg %p111
      %p118 = scmp.eq.s32.totalorder %s13, 1
      %p119 = por %p117, %p118
      %p120 = scmp.ne.s32.totalorder %s112, %s115
      %p121 = scmp.eq.s32.totalorder %s13, 0
      %p122 = por %p120, %p121
      %p123 = scmp.ne.s32.totalorder %s112, %s115
      %p124 = scmp.eq.s32.totalorder %s18, 1
      %p125 = por %p123, %p124
      %p126 = scmp.ne.s32.totalorder %s115, %s116
      %p127 = scmp.eq.s32.totalorder %s18, 0
      %p128 = por %p126, %p127
      %p129 = scmp.ne.s32.totalorder %s115, %s116
      %p130 = scmp.eq.s32.totalorder %s19, 1
      %p131 = por %p129, %p130
      %p133 = scmp.ne.s32.totalorder %s116, %s132
      %p134 = scmp.eq.s32.totalorder %s19, 0
      %p135 = por %p133, %p134
      %p136 = scmp.le.s32.totalorder 1, %s13
      %p137 = scmp.lt.s32.totalorder %s13, 3
      %p138 = pnand %p136, %p137
      %p139 = pneg %p138
      // Predicated region
      $region9: #{tpu_custom_call.1} parent=5 // pred_check
        _
      $region10: #{tpu_custom_call.1} parent=5 // pred_check_branch
        %141 = sbr.rel (%p138) target = $region12
      $region11: #{tpu_custom_call.1} parent=5 // pred_region
        %s142 = ssub.s32 %s13, 1
        // Predicated region
        $region13: #{tpu_custom_call.1} parent=11 // pred_check
          %p143 = pneg %p60
        $region14: #{tpu_custom_call.1} parent=11 // pred_check_branch
          %145 = sbr.rel (%p143) target = $region16
        $region15: #{tpu_custom_call.1} parent=11 // pred_region
          _
        $region16: #{tpu_custom_call.1} parent=11 // pred_fallthru
          _
        // Predicated region
        $region17: #{tpu_custom_call.1} parent=11 // pred_check
          %p146 = pneg %p81
        $region18: #{tpu_custom_call.1} parent=11 // pred_check_branch
          %148 = sbr.rel (%p146) target = $region20
        $region19: #{tpu_custom_call.1} parent=11 // pred_region
          _
        $region20: #{tpu_custom_call.1} parent=11 // pred_fallthru
          _
        // Predicated region
        $region21: #{tpu_custom_call.1} parent=11 // pred_check
          %p149 = pneg %p102
        $region22: #{tpu_custom_call.1} parent=11 // pred_check_branch
          %151 = sbr.rel (%p149) target = $region24
        $region23: #{tpu_custom_call.1} parent=11 // pred_region
          _
        $region24: #{tpu_custom_call.1} parent=11 // pred_fallthru
          _
      $region12: #{tpu_custom_call.1} parent=5 // pred_fallthru
        _
      %p152 = scmp.lt.s32.totalorder %s13, 2
      // Predicated region
      $region25: #{tpu_custom_call.1} parent=5 // pred_check
        %p153 = pneg %p152
      $region26: #{tpu_custom_call.1} parent=5 // pred_check_branch
        %155 = sbr.rel (%p153) target = $region28
      $region27: #{tpu_custom_call.1} parent=5 // pred_region
        // Predicated region
        $region29: #{tpu_custom_call.1} parent=27 // pred_check
          %p156 = pneg %p33
        $region30: #{tpu_custom_call.1} parent=27 // pred_check_branch
          %158 = sbr.rel (%p156) target = $region32
        $region31: #{tpu_custom_call.1} parent=27 // pred_region
          %p159 = scmp.lt.s32.totalorder %s13, 1
          %s160 = scalar_select %p159, %s13, 1
          %s161 = smul.addr %s160, 18
          %s162 = smul.addr %s161, 4
          %s163 = scalar_lea.vmem %s0, %s162
        $region32: #{tpu_custom_call.1} parent=27 // pred_fallthru
          _
      $region28: #{tpu_custom_call.1} parent=5 // pred_fallthru
        _
      %p164 = scmp.le.s32.totalorder 1, %s13
      %p165 = scmp.lt.s32.totalorder %s13, 3
      %p166 = pnand %p164, %p165
      %p167 = pneg %p166
      // Predicated region
      $region33: #{tpu_custom_call.1} parent=5 // pred_check
        _
      $region34: #{tpu_custom_call.1} parent=5 // pred_check_branch
        %169 = sbr.rel (%p166) target = $region36
      $region35: #{tpu_custom_call.1} parent=5 // pred_region
        %s170 = ssub.s32 %s13, 1
        %p171 = scmp.lt.s32.totalorder %s18, 1
        %s172 = scalar_select %p171, %s18, 1
        %s173 = smul.addr %s172, 18
        %s174 = smul.addr %s173, 4
        %s175 = scalar_lea.vmem %s0, %s174
        %p176 = pneg %p39
        %p177 = pneg %p36
        %p178 = pneg %p60
        %p179 = pneg %p57
        %p180 = pneg %p81
        %p181 = pneg %p78
        %p182 = pneg %p102
        %p183 = pneg %p99
        %p184 = pneg %p128
        %p185 = pneg %p125
        %s186 = sand.u32 %s115, 1
        %s187 = scalar_lea.sflag [#allocation4], %s186
        %s188 = sand.u32 %s115, 1
        %s189 = smul.addr %s188, 32
        %s190 = scalar_lea.vmem [#allocation3], %s189
        %p191 = scmp.lt.s32.totalorder %s18, 1
        %s192 = scalar_select %p191, %s18, 1
        %s193 = smul.addr %s192, 18
        %s194 = smul.addr %s193, 4
        %s195 = scalar_lea.vmem %s0, %s194
        %v197 = vld [vmem:[%s2] sm:$0x1]
        %v198 = vld [vmem:[%s3] sm:$0x1]
        %s199 = smul.u32 0, 2
        %s200 = smul.addr %s199, 4
        %s201 = scalar_lea.vmem %s195, %s200
        %v202 = vld [vmem:[%s201] sm:$0xf]
        %v203 = vld [vmem:[%s201 + $0x4] sm:$0x1]
        %v204 = vld [vmem:[%s201 + $0x8] sm:$0xf]
        %v205 = vld [vmem:[%s201 + $0xc] sm:$0x1]
        %v206 = vld [vmem:[%s201 + $0x10] sm:$0xf]
        %v207 = vld [vmem:[%s201 + $0x14] sm:$0x1]
        %v208 = vld [vmem:[%s201 + $0x18] sm:$0xf]
        %v209 = vld [vmem:[%s201 + $0x1c] sm:$0x1]
        %v210 = vld [vmem:[%s201 + $0x20] sm:$0xf]
        %v211 = vld [vmem:[%s201 + $0x24] sm:$0x1]
        %v212 = vld [vmem:[%s201 + $0x28] sm:$0xf]
        %v213 = vld [vmem:[%s201 + $0x2c] sm:$0x1]
        %v214 = vld [vmem:[%s201 + $0x30] sm:$0xf]
        %v215 = vld [vmem:[%s201 + $0x34] sm:$0x1]
        %v216 = vld [vmem:[%s201 + $0x38] sm:$0xf]
        %v217 = vld [vmem:[%s201 + $0x3c] sm:$0x1]
        %v234 = vunpack.c.l.b16 %v202
        %v235 = vunpack.c.l.b16 %v203
        %v236 = vunpack.c.l.b16 %v204
        %v237 = vunpack.c.l.b16 %v205
        %v238 = vunpack.c.l.b16 %v206
        %v239 = vunpack.c.l.b16 %v207
        %v240 = vunpack.c.l.b16 %v208
        %v241 = vunpack.c.l.b16 %v209
        %v242 = vunpack.c.l.b16 %v210
        %v243 = vunpack.c.l.b16 %v211
        %v244 = vunpack.c.l.b16 %v212
        %v245 = vunpack.c.l.b16 %v213
        %v246 = vunpack.c.l.b16 %v214
        %v247 = vunpack.c.l.b16 %v215
        %v248 = vunpack.c.l.b16 %v216
        %v249 = vunpack.c.l.b16 %v217
        %v250 = vpack.c.b16 %v235, %v234
        %v251 = vpack.c.b16 %v237, %v236
        %v252 = vpack.c.b16 %v239, %v238
        %v253 = vpack.c.b16 %v241, %v240
        %v254 = vpack.c.b16 %v243, %v242
        %v255 = vpack.c.b16 %v245, %v244
        %v256 = vpack.c.b16 %v247, %v246
        %v257 = vpack.c.b16 %v249, %v248
        %v259 = vshrl.u32 %v250, 16
        %v261 = vshll.u32 %v250, 16
        %v263 = vrot.slane %v261, 1
        %v264 = vor.u32 %v259, %v263
        %v266 = vshrl.u32 %v251, 16
        %v268 = vshll.u32 %v251, 16
        %v270 = vrot.slane %v268, 1
        %v271 = vor.u32 %v266, %v270
        %v273 = vshrl.u32 %v252, 16
        %v275 = vshll.u32 %v252, 16
        %v277 = vrot.slane %v275, 1
        %v278 = vor.u32 %v273, %v277
        %v280 = vshrl.u32 %v253, 16
        %v282 = vshll.u32 %v253, 16
        %v284 = vrot.slane %v282, 1
        %v285 = vor.u32 %v280, %v284
        %v287 = vshrl.u32 %v254, 16
        %v289 = vshll.u32 %v254, 16
        %v291 = vrot.slane %v289, 1
        %v292 = vor.u32 %v287, %v291
        %v294 = vshrl.u32 %v255, 16
        %v296 = vshll.u32 %v255, 16
        %v298 = vrot.slane %v296, 1
        %v299 = vor.u32 %v294, %v298
        %v301 = vshrl.u32 %v256, 16
        %v303 = vshll.u32 %v256, 16
        %v305 = vrot.slane %v303, 1
        %v306 = vor.u32 %v301, %v305
        %v308 = vshrl.u32 %v257, 16
        %v310 = vshll.u32 %v257, 16
        %v312 = vrot.slane %v310, 1
        %v313 = vor.u32 %v308, %v312
        %v314 = vunpack.c.l.b16 %v264
        %v315 = vunpack.c.l.b16 %v271
        %v316 = vunpack.c.l.b16 %v278
        %v317 = vunpack.c.l.b16 %v285
        %v318 = vunpack.c.l.b16 %v292
        %v319 = vunpack.c.l.b16 %v299
        %v320 = vunpack.c.l.b16 %v306
        %v321 = vunpack.c.l.b16 %v313
        %v322 = vld [vmem:[%s1] sm:$0xf]
        %v323 = vld [vmem:[%s1 + $0x4] sm:$0xf]
        %v324 = vld [vmem:[%s1 + $0x8] sm:$0xf]
        %v325 = vld [vmem:[%s1 + $0xc] sm:$0xf]
        %v326 = vld [vmem:[%s1 + $0x10] sm:$0xf]
        %v327 = vld [vmem:[%s1 + $0x14] sm:$0xf]
        %v328 = vld [vmem:[%s1 + $0x18] sm:$0xf]
        %v329 = vld [vmem:[%s1 + $0x1c] sm:$0xf]
        %v330 = vld [vmem:[%s1 + $0x20] sm:$0xf]
        %v331 = vld [vmem:[%s1 + $0x24] sm:$0xf]
        %v332 = vld [vmem:[%s1 + $0x28] sm:$0xf]
        %v333 = vld [vmem:[%s1 + $0x2c] sm:$0xf]
        %v334 = vld [vmem:[%s1 + $0x30] sm:$0xf]
        %v335 = vld [vmem:[%s1 + $0x34] sm:$0xf]
        %v336 = vld [vmem:[%s1 + $0x38] sm:$0xf]
        %v337 = vld [vmem:[%s1 + $0x3c] sm:$0xf]
        %v338 = vld [vmem:[%s1 + $0x40] sm:$0xf]
        %v339 = vld [vmem:[%s1 + $0x44] sm:$0xf]
        %v340 = vld [vmem:[%s1 + $0x48] sm:$0xf]
        %v341 = vld [vmem:[%s1 + $0x4c] sm:$0xf]
        %v342 = vld [vmem:[%s1 + $0x50] sm:$0xf]
        %v343 = vld [vmem:[%s1 + $0x54] sm:$0xf]
        %v344 = vld [vmem:[%s1 + $0x58] sm:$0xf]
        %v345 = vld [vmem:[%s1 + $0x5c] sm:$0xf]
        %v346 = vld [vmem:[%s1 + $0x60] sm:$0xf]
        %v347 = vld [vmem:[%s1 + $0x64] sm:$0xf]
        %v348 = vld [vmem:[%s1 + $0x68] sm:$0xf]
        %v349 = vld [vmem:[%s1 + $0x6c] sm:$0xf]
        %v350 = vld [vmem:[%s1 + $0x70] sm:$0xf]
        %v351 = vld [vmem:[%s1 + $0x74] sm:$0xf]
        %v352 = vld [vmem:[%s1 + $0x78] sm:$0xf]
        %v353 = vld [vmem:[%s1 + $0x7c] sm:$0xf]
        %v354 = vpack.c.b16 %v236, %v234
        %v355 = vpack.c.b16 %v315, %v314
        %v356 = vpack.c.b16 %v240, %v238
        %v357 = vpack.c.b16 %v317, %v316
        %v358 = vpack.c.b16 %v244, %v242
        %v359 = vpack.c.b16 %v319, %v318
        %v360 = vpack.c.b16 %v248, %v246
        %v361 = vpack.c.b16 %v321, %v320
        %v402 = vunpack.c.l.b16 %v322
        %v403 = vunpack.c.l.b16 %v323
        %v404 = vunpack.c.l.b16 %v324
        %v405 = vunpack.c.l.b16 %v325
        %v406 = vunpack.c.l.b16 %v326
        %v407 = vunpack.c.l.b16 %v327
        %v408 = vunpack.c.l.b16 %v328
        %v409 = vunpack.c.l.b16 %v329
        %v410 = vunpack.c.l.b16 %v330
        %v411 = vunpack.c.l.b16 %v331
        %v412 = vunpack.c.l.b16 %v332
        %v413 = vunpack.c.l.b16 %v333
        %v414 = vunpack.c.l.b16 %v334
        %v415 = vunpack.c.l.b16 %v335
        %v416 = vunpack.c.l.b16 %v336
        %v417 = vunpack.c.l.b16 %v337
        %v418 = vunpack.c.l.b16 %v338
        %v419 = vunpack.c.l.b16 %v339
        %v420 = vunpack.c.l.b16 %v340
        %v421 = vunpack.c.l.b16 %v341
        %v422 = vunpack.c.l.b16 %v342
        %v423 = vunpack.c.l.b16 %v343
        %v424 = vunpack.c.l.b16 %v344
        %v425 = vunpack.c.l.b16 %v345
        %v426 = vunpack.c.l.b16 %v346
        %v427 = vunpack.c.l.b16 %v347
        %v428 = vunpack.c.l.b16 %v348
        %v429 = vunpack.c.l.b16 %v349
        %v430 = vunpack.c.l.b16 %v350
        %v431 = vunpack.c.l.b16 %v351
        %v432 = vunpack.c.l.b16 %v352
        %v433 = vunpack.c.l.b16 %v353
        %v434 = vpack.c.b16 %v403, %v402
        %v435 = vpack.c.b16 %v405, %v404
        %v436 = vpack.c.b16 %v407, %v406
        %v437 = vpack.c.b16 %v409, %v408
        %v438 = vpack.c.b16 %v411, %v410
        %v439 = vpack.c.b16 %v413, %v412
        %v440 = vpack.c.b16 %v415, %v414
        %v441 = vpack.c.b16 %v417, %v416
        %v442 = vpack.c.b16 %v419, %v418
        %v443 = vpack.c.b16 %v421, %v420
        %v444 = vpack.c.b16 %v423, %v422
        %v445 = vpack.c.b16 %v425, %v424
        %v446 = vpack.c.b16 %v427, %v426
        %v447 = vpack.c.b16 %v429, %v428
        %v448 = vpack.c.b16 %v431, %v430
        %v449 = vpack.c.b16 %v433, %v432
        %466 = vmatprep.subr.bf16.mxu0 0
        %467 = vmatpush1.bf16.msra.mxu0 %v441
        %468 = vmatprep.subr.bf16.mxu0 0
        %469 = vmatpush1.bf16.msra.mxu0 %v440
        %470 = vmatprep.subr.bf16.mxu0 0
        %471 = vmatpush1.bf16.msra.mxu0 %v439
        %472 = vmatprep.subr.bf16.mxu0 0
        %473 = vmatpush1.bf16.msra.mxu0 %v438
        %474 = vmatprep.subr.bf16.mxu0 0
        %475 = vmatpush1.bf16.msra.mxu0 %v437
        %476 = vmatprep.subr.bf16.mxu0 0
        %477 = vmatpush1.bf16.msra.mxu0 %v436
        %478 = vmatprep.subr.bf16.mxu0 0
        %479 = vmatpush1.bf16.msra.mxu0 %v435
        %480 = vmatprep.subr.bf16.mxu0 0
        %481 = vmatpush1.bf16.msra.mxu0 %v434
        %482 = vmatprep.subr.bf16.mxu0 0
        %483 = vmatpush2.bf16.msra.mxu0 %v449
        %484 = vmatprep.subr.bf16.mxu0 0
        %485 = vmatpush2.bf16.msra.mxu0 %v448
        %486 = vmatprep.subr.bf16.mxu0 0
        %487 = vmatpush2.bf16.msra.mxu0 %v447
        %488 = vmatprep.subr.bf16.mxu0 0
        %489 = vmatpush2.bf16.msra.mxu0 %v446
        %490 = vmatprep.subr.bf16.mxu0 0
        %491 = vmatpush2.bf16.msra.mxu0 %v445
        %492 = vmatprep.subr.bf16.mxu0 0
        %493 = vmatpush2.bf16.msra.mxu0 %v444
        %494 = vmatprep.subr.bf16.mxu0 0
        %495 = vmatpush2.bf16.msra.mxu0 %v443
        %496 = vmatprep.subr.bf16.mxu0 0
        %497 = vmatpush2.bf16.msra.mxu0 %v442
        %498 = vmatprep.mubr.bf16.mxu0 %v355
        %499 = vmatmul.mubr.bf16.gmra.mxu0 %v354
        %v500 = vpop.f32.mrf.mxu0
        %v501 = vadd.f32 0.0, %v500
        %v502 = vpop.f32.mrf.mxu0
        %v503 = vpop.f32.mrf.mxu0
        %v504 = vadd.f32 0.0, %v503
        %v505 = vpop.f32.mrf.mxu0
        %506 = vmatprep.mubr.bf16.mxu0 %v357
        %507 = vmatmul.mubr.bf16.gmra.mxu0 %v356
        %v508 = vpop.f32.mrf.mxu0
        %v509 = vadd.f32 0.0, %v508
        %v510 = vpop.f32.mrf.mxu0
        %v511 = vpop.f32.mrf.mxu0
        %v512 = vadd.f32 0.0, %v511
        %v513 = vpop.f32.mrf.mxu0
        %514 = vmatprep.mubr.bf16.mxu0 %v359
        %515 = vmatmul.mubr.bf16.gmra.mxu0 %v358
        %v516 = vpop.f32.mrf.mxu0
        %v517 = vadd.f32 0.0, %v516
        %v518 = vpop.f32.mrf.mxu0
        %v519 = vpop.f32.mrf.mxu0
        %v520 = vadd.f32 0.0, %v519
        %v521 = vpop.f32.mrf.mxu0
        %522 = vmatprep.mubr.bf16.mxu0 %v361
        %523 = vmatmul.mubr.bf16.gmra.mxu0 %v360
        %v524 = vpop.f32.mrf.mxu0
        %v525 = vadd.f32 0.0, %v524
        %v526 = vpop.f32.mrf.mxu0
        %v527 = vpop.f32.mrf.mxu0
        %v528 = vadd.f32 0.0, %v527
        %v529 = vpop.f32.mrf.mxu0
        %530 = vdwg.mxu0
        %vm531 = vcmask 523264
        %532 = vst.msk [vmem:[#allocation2] sm:$0xff] %vm531, %v501
        %533 = vst.msk [vmem:[#allocation2 + $0x8] sm:$0xff] %vm531, %v504
        %534 = vst.msk [vmem:[#allocation2 + $0x10] sm:$0xff] %vm531, %v509
        %535 = vst.msk [vmem:[#allocation2 + $0x18] sm:$0xff] %vm531, %v512
        %536 = vst.msk [vmem:[#allocation2 + $0x20] sm:$0xff] %vm531, %v517
        %537 = vst.msk [vmem:[#allocation2 + $0x28] sm:$0xff] %vm531, %v520
        %538 = vst.msk [vmem:[#allocation2 + $0x30] sm:$0xff] %vm531, %v525
        %539 = vst.msk [vmem:[#allocation2 + $0x38] sm:$0xff] %vm531, %v528
        %s540 = sadd.s32 0, 1
        %s541 = smul.u32 %s540, 2
        %s542 = smul.addr %s541, 4
        %s543 = scalar_lea.vmem %s195, %s542
        %v544 = vld [vmem:[%s543] sm:$0xf]
        %v545 = vld [vmem:[%s543 + $0x4] sm:$0x1]
        %v546 = vld [vmem:[%s543 + $0x8] sm:$0xf]
        %v547 = vld [vmem:[%s543 + $0xc] sm:$0x1]
        %v548 = vld [vmem:[%s543 + $0x10] sm:$0xf]
        %v549 = vld [vmem:[%s543 + $0x14] sm:$0x1]
        %v550 = vld [vmem:[%s543 + $0x18] sm:$0xf]
        %v551 = vld [vmem:[%s543 + $0x1c] sm:$0x1]
        %v552 = vld [vmem:[%s543 + $0x20] sm:$0xf]
        %v553 = vld [vmem:[%s543 + $0x24] sm:$0x1]
        %v554 = vld [vmem:[%s543 + $0x28] sm:$0xf]
        %v555 = vld [vmem:[%s543 + $0x2c] sm:$0x1]
        %v556 = vld [vmem:[%s543 + $0x30] sm:$0xf]
        %v557 = vld [vmem:[%s543 + $0x34] sm:$0x1]
        %v558 = vld [vmem:[%s543 + $0x38] sm:$0xf]
        %v559 = vld [vmem:[%s543 + $0x3c] sm:$0x1]
        %v576 = vunpack.c.l.b16 %v544
        %v577 = vunpack.c.l.b16 %v545
        %v578 = vunpack.c.l.b16 %v546
        %v579 = vunpack.c.l.b16 %v547
        %v580 = vunpack.c.l.b16 %v548
        %v581 = vunpack.c.l.b16 %v549
        %v582 = vunpack.c.l.b16 %v550
        %v583 = vunpack.c.l.b16 %v551
        %v584 = vunpack.c.l.b16 %v552
        %v585 = vunpack.c.l.b16 %v553
        %v586 = vunpack.c.l.b16 %v554
        %v587 = vunpack.c.l.b16 %v555
        %v588 = vunpack.c.l.b16 %v556
        %v589 = vunpack.c.l.b16 %v557
        %v590 = vunpack.c.l.b16 %v558
        %v591 = vunpack.c.l.b16 %v559
        %v592 = vpack.c.b16 %v577, %v576
        %v593 = vpack.c.b16 %v579, %v578
        %v594 = vpack.c.b16 %v581, %v580
        %v595 = vpack.c.b16 %v583, %v582
        %v596 = vpack.c.b16 %v585, %v584
        %v597 = vpack.c.b16 %v587, %v586
        %v598 = vpack.c.b16 %v589, %v588
        %v599 = vpack.c.b16 %v591, %v590
        %v601 = vshrl.u32 %v592, 16
        %v603 = vshll.u32 %v592, 16
        %v605 = vrot.slane %v603, 1
        %v606 = vor.u32 %v601, %v605
        %v608 = vshrl.u32 %v593, 16
        %v610 = vshll.u32 %v593, 16
        %v612 = vrot.slane %v610, 1
        %v613 = vor.u32 %v608, %v612
        %v615 = vshrl.u32 %v594, 16
        %v617 = vshll.u32 %v594, 16
        %v619 = vrot.slane %v617, 1
        %v620 = vor.u32 %v615, %v619
        %v622 = vshrl.u32 %v595, 16
        %v624 = vshll.u32 %v595, 16
        %v626 = vrot.slane %v624, 1
        %v627 = vor.u32 %v622, %v626
        %v629 = vshrl.u32 %v596, 16
        %v631 = vshll.u32 %v596, 16
        %v633 = vrot.slane %v631, 1
        %v634 = vor.u32 %v629, %v633
        %v636 = vshrl.u32 %v597, 16
        %v638 = vshll.u32 %v597, 16
        %v640 = vrot.slane %v638, 1
        %v641 = vor.u32 %v636, %v640
        %v643 = vshrl.u32 %v598, 16
        %v645 = vshll.u32 %v598, 16
        %v647 = vrot.slane %v645, 1
        %v648 = vor.u32 %v643, %v647
        %v650 = vshrl.u32 %v599, 16
        %v652 = vshll.u32 %v599, 16
        %v654 = vrot.slane %v652, 1
        %v655 = vor.u32 %v650, %v654
        %v656 = vunpack.c.l.b16 %v606
        %v657 = vunpack.c.l.b16 %v613
        %v658 = vunpack.c.l.b16 %v620
        %v659 = vunpack.c.l.b16 %v627
        %v660 = vunpack.c.l.b16 %v634
        %v661 = vunpack.c.l.b16 %v641
        %v662 = vunpack.c.l.b16 %v648
        %v663 = vunpack.c.l.b16 %v655
        %s664 = scalar_lea.vmem %s1, 128
        %v665 = vld [vmem:[%s664] sm:$0xf]
        %v666 = vld [vmem:[%s664 + $0x4] sm:$0xf]
        %v667 = vld [vmem:[%s664 + $0x8] sm:$0xf]
        %v668 = vld [vmem:[%s664 + $0xc] sm:$0xf]
        %v669 = vld [vmem:[%s664 + $0x10] sm:$0xf]
        %v670 = vld [vmem:[%s664 + $0x14] sm:$0xf]
        %v671 = vld [vmem:[%s664 + $0x18] sm:$0xf]
        %v672 = vld [vmem:[%s664 + $0x1c] sm:$0xf]
        %v673 = vld [vmem:[%s664 + $0x20] sm:$0xf]
        %v674 = vld [vmem:[%s664 + $0x24] sm:$0xf]
        %v675 = vld [vmem:[%s664 + $0x28] sm:$0xf]
        %v676 = vld [vmem:[%s664 + $0x2c] sm:$0xf]
        %v677 = vld [vmem:[%s664 + $0x30] sm:$0xf]
        %v678 = vld [vmem:[%s664 + $0x34] sm:$0xf]
        %v679 = vld [vmem:[%s664 + $0x38] sm:$0xf]
        %v680 = vld [vmem:[%s664 + $0x3c] sm:$0xf]
        %v681 = vld [vmem:[%s664 + $0x40] sm:$0xf]
        %v682 = vld [vmem:[%s664 + $0x44] sm:$0xf]
        %v683 = vld [vmem:[%s664 + $0x48] sm:$0xf]
        %v684 = vld [vmem:[%s664 + $0x4c] sm:$0xf]
        %v685 = vld [vmem:[%s664 + $0x50] sm:$0xf]
        %v686 = vld [vmem:[%s664 + $0x54] sm:$0xf]
        %v687 = vld [vmem:[%s664 + $0x58] sm:$0xf]
        %v688 = vld [vmem:[%s664 + $0x5c] sm:$0xf]
        %v689 = vld [vmem:[%s664 + $0x60] sm:$0xf]
        %v690 = vld [vmem:[%s664 + $0x64] sm:$0xf]
        %v691 = vld [vmem:[%s664 + $0x68] sm:$0xf]
        %v692 = vld [vmem:[%s664 + $0x6c] sm:$0xf]
        %v693 = vld [vmem:[%s664 + $0x70] sm:$0xf]
        %v694 = vld [vmem:[%s664 + $0x74] sm:$0xf]
        %v695 = vld [vmem:[%s664 + $0x78] sm:$0xf]
        %v696 = vld [vmem:[%s664 + $0x7c] sm:$0xf]
        %v697 = vpack.c.b16 %v578, %v576
        %v698 = vpack.c.b16 %v657, %v656
        %v699 = vpack.c.b16 %v582, %v580
        %v700 = vpack.c.b16 %v659, %v658
        %v701 = vpack.c.b16 %v586, %v584
        %v702 = vpack.c.b16 %v661, %v660
        %v703 = vpack.c.b16 %v590, %v588
        %v704 = vpack.c.b16 %v663, %v662
        %v745 = vunpack.c.l.b16 %v665
        %v746 = vunpack.c.l.b16 %v666
        %v747 = vunpack.c.l.b16 %v667
        %v748 = vunpack.c.l.b16 %v668
        %v749 = vunpack.c.l.b16 %v669
        %v750 = vunpack.c.l.b16 %v670
        %v751 = vunpack.c.l.b16 %v671
        %v752 = vunpack.c.l.b16 %v672
        %v753 = vunpack.c.l.b16 %v673
        %v754 = vunpack.c.l.b16 %v674
        %v755 = vunpack.c.l.b16 %v675
        %v756 = vunpack.c.l.b16 %v676
        %v757 = vunpack.c.l.b16 %v677
        %v758 = vunpack.c.l.b16 %v678
        %v759 = vunpack.c.l.b16 %v679
        %v760 = vunpack.c.l.b16 %v680
        %v761 = vunpack.c.l.b16 %v681
        %v762 = vunpack.c.l.b16 %v682
        %v763 = vunpack.c.l.b16 %v683
        %v764 = vunpack.c.l.b16 %v684
        %v765 = vunpack.c.l.b16 %v685
        %v766 = vunpack.c.l.b16 %v686
        %v767 = vunpack.c.l.b16 %v687
        %v768 = vunpack.c.l.b16 %v688
        %v769 = vunpack.c.l.b16 %v689
        %v770 = vunpack.c.l.b16 %v690
        %v771 = vunpack.c.l.b16 %v691
        %v772 = vunpack.c.l.b16 %v692
        %v773 = vunpack.c.l.b16 %v693
        %v774 = vunpack.c.l.b16 %v694
        %v775 = vunpack.c.l.b16 %v695
        %v776 = vunpack.c.l.b16 %v696
        %v777 = vpack.c.b16 %v746, %v745
        %v778 = vpack.c.b16 %v748, %v747
        %v779 = vpack.c.b16 %v750, %v749
        %v780 = vpack.c.b16 %v752, %v751
        %v781 = vpack.c.b16 %v754, %v753
        %v782 = vpack.c.b16 %v756, %v755
        %v783 = vpack.c.b16 %v758, %v757
        %v784 = vpack.c.b16 %v760, %v759
        %v785 = vpack.c.b16 %v762, %v761
        %v786 = vpack.c.b16 %v764, %v763
        %v787 = vpack.c.b16 %v766, %v765
        %v788 = vpack.c.b16 %v768, %v767
        %v789 = vpack.c.b16 %v770, %v769
        %v790 = vpack.c.b16 %v772, %v771
        %v791 = vpack.c.b16 %v774, %v773
        %v792 = vpack.c.b16 %v776, %v775
        %809 = vmatprep.subr.bf16.mxu0 0
        %810 = vmatpush1.bf16.msra.mxu0 %v784
        %811 = vmatprep.subr.bf16.mxu0 0
        %812 = vmatpush1.bf16.msra.mxu0 %v783
        %813 = vmatprep.subr.bf16.mxu0 0
        %814 = vmatpush1.bf16.msra.mxu0 %v782
        %815 = vmatprep.subr.bf16.mxu0 0
        %816 = vmatpush1.bf16.msra.mxu0 %v781
        %817 = vmatprep.subr.bf16.mxu0 0
        %818 = vmatpush1.bf16.msra.mxu0 %v780
        %819 = vmatprep.subr.bf16.mxu0 0
        %820 = vmatpush1.bf16.msra.mxu0 %v779
        %821 = vmatprep.subr.bf16.mxu0 0
        %822 = vmatpush1.bf16.msra.mxu0 %v778
        %823 = vmatprep.subr.bf16.mxu0 0
        %824 = vmatpush1.bf16.msra.mxu0 %v777
        %825 = vmatprep.subr.bf16.mxu0 0
        %826 = vmatpush2.bf16.msra.mxu0 %v792
        %827 = vmatprep.subr.bf16.mxu0 0
        %828 = vmatpush2.bf16.msra.mxu0 %v791
        %829 = vmatprep.subr.bf16.mxu0 0
        %830 = vmatpush2.bf16.msra.mxu0 %v790
        %831 = vmatprep.subr.bf16.mxu0 0
        %832 = vmatpush2.bf16.msra.mxu0 %v789
        %833 = vmatprep.subr.bf16.mxu0 0
        %834 = vmatpush2.bf16.msra.mxu0 %v788
        %835 = vmatprep.subr.bf16.mxu0 0
        %836 = vmatpush2.bf16.msra.mxu0 %v787
        %837 = vmatprep.subr.bf16.mxu0 0
        %838 = vmatpush2.bf16.msra.mxu0 %v786
        %839 = vmatprep.subr.bf16.mxu0 0
        %840 = vmatpush2.bf16.msra.mxu0 %v785
        %841 = vmatprep.mubr.bf16.mxu0 %v698
        %842 = vmatmul.mubr.bf16.gmra.mxu0 %v697
        %v843 = vpop.f32.mrf.mxu0
        %v844 = vadd.f32 0.0, %v843
        %v845 = vpop.f32.mrf.mxu0
        %v846 = vpop.f32.mrf.mxu0
        %v847 = vadd.f32 0.0, %v846
        %v848 = vpop.f32.mrf.mxu0
        %849 = vmatprep.mubr.bf16.mxu0 %v700
        %850 = vmatmul.mubr.bf16.gmra.mxu0 %v699
        %v851 = vpop.f32.mrf.mxu0
        %v852 = vadd.f32 0.0, %v851
        %v853 = vpop.f32.mrf.mxu0
        %v854 = vpop.f32.mrf.mxu0
        %v855 = vadd.f32 0.0, %v854
        %v856 = vpop.f32.mrf.mxu0
        %857 = vmatprep.mubr.bf16.mxu0 %v702
        %858 = vmatmul.mubr.bf16.gmra.mxu0 %v701
        %v859 = vpop.f32.mrf.mxu0
        %v860 = vadd.f32 0.0, %v859
        %v861 = vpop.f32.mrf.mxu0
        %v862 = vpop.f32.mrf.mxu0
        %v863 = vadd.f32 0.0, %v862
        %v864 = vpop.f32.mrf.mxu0
        %865 = vmatprep.mubr.bf16.mxu0 %v704
        %866 = vmatmul.mubr.bf16.gmra.mxu0 %v703
        %v867 = vpop.f32.mrf.mxu0
        %v868 = vadd.f32 0.0, %v867
        %v869 = vpop.f32.mrf.mxu0
        %v870 = vpop.f32.mrf.mxu0
        %v871 = vadd.f32 0.0, %v870
        %v872 = vpop.f32.mrf.mxu0
        %873 = vdwg.mxu0
        %v874 = vld [vmem:[#allocation2] sm:$0xff]
        %v875 = vld [vmem:[#allocation2 + $0x8] sm:$0xff]
        %v876 = vld [vmem:[#allocation2 + $0x10] sm:$0xff]
        %v877 = vld [vmem:[#allocation2 + $0x18] sm:$0xff]
        %v878 = vld [vmem:[#allocation2 + $0x20] sm:$0xff]
        %v879 = vld [vmem:[#allocation2 + $0x28] sm:$0xff]
        %v880 = vld [vmem:[#allocation2 + $0x30] sm:$0xff]
        %v881 = vld [vmem:[#allocation2 + $0x38] sm:$0xff]
        %v882 = vadd.f32 %v874, %v844
        %v883 = vadd.f32 %v875, %v847
        %v884 = vadd.f32 %v876, %v852
        %v885 = vadd.f32 %v877, %v855
        %v886 = vadd.f32 %v878, %v860
        %v887 = vadd.f32 %v879, %v863
        %v888 = vadd.f32 %v880, %v868
        %v889 = vadd.f32 %v881, %v871
        %890 = vst.msk [vmem:[#allocation2] sm:$0xff] %vm531, %v882
        %891 = vst.msk [vmem:[#allocation2 + $0x8] sm:$0xff] %vm531, %v883
        %892 = vst.msk [vmem:[#allocation2 + $0x10] sm:$0xff] %vm531, %v884
        %893 = vst.msk [vmem:[#allocation2 + $0x18] sm:$0xff] %vm531, %v885
        %894 = vst.msk [vmem:[#allocation2 + $0x20] sm:$0xff] %vm531, %v886
        %895 = vst.msk [vmem:[#allocation2 + $0x28] sm:$0xff] %vm531, %v887
        %896 = vst.msk [vmem:[#allocation2 + $0x30] sm:$0xff] %vm531, %v888
        %897 = vst.msk [vmem:[#allocation2 + $0x38] sm:$0xff] %vm531, %v889
        %v898 = vld [vmem:[#allocation2] sm:$0xff]
        %v899 = vld [vmem:[#allocation2 + $0x8] sm:$0xff]
        %v900 = vld [vmem:[#allocation2 + $0x10] sm:$0xff]
        %v901 = vld [vmem:[#allocation2 + $0x18] sm:$0xff]
        %v902 = vld [vmem:[#allocation2 + $0x20] sm:$0xff]
        %v903 = vld [vmem:[#allocation2 + $0x28] sm:$0xff]
        %v904 = vld [vmem:[#allocation2 + $0x30] sm:$0xff]
        %v905 = vld [vmem:[#allocation2 + $0x38] sm:$0xff]
        %v907 = vlaneseq
        %v908 = vshrl.u32 %v907, 7
        %v909 = vsub.s32 0, %v908
        %v910 = vrot.slane %v197, %v909
        %v912 = vmul.f32 %v898, %v910
        %v913 = vmul.f32 %v899, %v910
        %v914 = vmul.f32 %v900, %v910
        %v915 = vmul.f32 %v901, %v910
        %v916 = vmul.f32 %v902, %v910
        %v917 = vmul.f32 %v903, %v910
        %v918 = vmul.f32 %v904, %v910
        %v919 = vmul.f32 %v905, %v910
        %v921 = vlaneseq
        %v922 = vshrl.u32 %v921, 7
        %v923 = vsub.s32 0, %v922
        %v924 = vrot.slane %v198, %v923
        %v926 = vadd.f32 %v912, %v924
        %v927 = vadd.f32 %v913, %v924
        %v928 = vadd.f32 %v914, %v924
        %v929 = vadd.f32 %v915, %v924
        %v930 = vadd.f32 %v916, %v924
        %v931 = vadd.f32 %v917, %v924
        %v932 = vadd.f32 %v918, %v924
        %v933 = vadd.f32 %v919, %v924
        %vm934 = vcmp.gt.f32.partialorder %v926, 0.0
        %vm935 = vcmp.gt.f32.partialorder %v927, 0.0
        %vm936 = vcmp.gt.f32.partialorder %v928, 0.0
        %vm937 = vcmp.gt.f32.partialorder %v929, 0.0
        %vm938 = vcmp.gt.f32.partialorder %v930, 0.0
        %vm939 = vcmp.gt.f32.partialorder %v931, 0.0
        %vm940 = vcmp.gt.f32.partialorder %v932, 0.0
        %vm941 = vcmp.gt.f32.partialorder %v933, 0.0
        %v942 = vmul.f32 %v926, 0.1
        %v943 = vmul.f32 %v927, 0.1
        %v944 = vmul.f32 %v928, 0.1
        %v945 = vmul.f32 %v929, 0.1
        %v946 = vmul.f32 %v930, 0.1
        %v947 = vmul.f32 %v931, 0.1
        %v948 = vmul.f32 %v932, 0.1
        %v949 = vmul.f32 %v933, 0.1
        %v950 = vsel %vm934, %v926, %v942
        %v951 = vsel %vm935, %v927, %v943
        %v952 = vsel %vm936, %v928, %v944
        %v953 = vsel %vm937, %v929, %v945
        %v954 = vsel %vm938, %v930, %v946
        %v955 = vsel %vm939, %v931, %v947
        %v956 = vsel %vm940, %v932, %v948
        %v957 = vsel %vm941, %v933, %v949
        %v958 = vpack.c.bf16 %v950, %v950
        %v959 = vpack.c.bf16 %v951, %v951
        %v960 = vpack.c.bf16 %v952, %v952
        %v961 = vpack.c.bf16 %v953, %v953
        %v962 = vpack.c.bf16 %v954, %v954
        %v963 = vpack.c.bf16 %v955, %v955
        %v964 = vpack.c.bf16 %v956, %v956
        %v965 = vpack.c.bf16 %v957, %v957
        %vm966 = vcmask 519168
        %967 = vst.msk [vmem:[%s190] sm:$0xf] %vm966, %v958
        %968 = vst.msk [vmem:[%s190 + $0x4] sm:$0xf] %vm966, %v959
        %969 = vst.msk [vmem:[%s190 + $0x8] sm:$0xf] %vm966, %v960
        %970 = vst.msk [vmem:[%s190 + $0xc] sm:$0xf] %vm966, %v961
        %971 = vst.msk [vmem:[%s190 + $0x10] sm:$0xf] %vm966, %v962
        %972 = vst.msk [vmem:[%s190 + $0x14] sm:$0xf] %vm966, %v963
        %973 = vst.msk [vmem:[%s190 + $0x18] sm:$0xf] %vm966, %v964
        %974 = vst.msk [vmem:[%s190 + $0x1c] sm:$0xf] %vm966, %v965
        %s975 = sand.u32 %s115, 1
        %s976 = scalar_lea.sflag [#allocation4], %s975
        %s977 = sand.u32 %s115, 1
        %s978 = smul.addr %s977, 32
        %s979 = scalar_lea.vmem [#allocation3], %s978
        // Predicated region
        $region37: #{tpu_custom_call.1} parent=35 // pred_check
          %p980 = pneg %p125
        $region38: #{tpu_custom_call.1} parent=35 // pred_check_branch
          %982 = sbr.rel (%p980) target = $region40
        $region39: #{tpu_custom_call.1} parent=35 // pred_region
          %s984 = ssub.s32 512, 512
          %985 = vsyncadd %s976, %s984
          %s986 = smul.addr %s18, 8
          %s987 = smul.addr %s986, 64
          %s988 = scalar_lea.hbm %s4, %s987
          %s989 = sshll.u32 %s979, 4
          %s990 = int_to_ptr.vmem [resolvable:$true] %s989
          %995 = dma.vmem_to_hbm [thread:$0]  %s990, 512, %s988, %s976, 64, 64, 4
        $region40: #{tpu_custom_call.1} parent=35 // pred_fallthru
          _
      $region36: #{tpu_custom_call.1} parent=5 // pred_fallthru
        _
      %p996 = scmp.le.s32.totalorder 2, %s13
      // Predicated region
      $region41: #{tpu_custom_call.1} parent=5 // pred_check
        %p997 = pneg %p996
      $region42: #{tpu_custom_call.1} parent=5 // pred_check_branch
        %999 = sbr.rel (%p997) target = $region44
      $region43: #{tpu_custom_call.1} parent=5 // pred_region
        %s1000 = ssub.s32 %s13, 2
        // Predicated region
        $region45: #{tpu_custom_call.1} parent=43 // pred_check
          %p1001 = pneg %p131
        $region46: #{tpu_custom_call.1} parent=43 // pred_check_branch
          %1003 = sbr.rel (%p1001) target = $region48
        $region47: #{tpu_custom_call.1} parent=43 // pred_region
          %s1004 = sand.u32 %s116, 1
          %s1005 = scalar_lea.sflag [#allocation4], %s1004
          %s1006 = sand.u32 %s116, 1
          %s1007 = smul.addr %s1006, 32
          %s1008 = scalar_lea.vmem [#allocation3], %s1007
          %1009 = dma.done %s1005, 512
        $region48: #{tpu_custom_call.1} parent=43 // pred_fallthru
          _
      $region44: #{tpu_custom_call.1} parent=5 // pred_fallthru
        _
    $region6: #{tpu_custom_call.1} parent=1 // loop_footer
      %s17 = sadd.s32 1, %s13
    $region7: #{tpu_custom_call.1} parent=1 // loop_footer_branch
      %12 = sbr.rel target = $region3
    $region8: #{tpu_custom_call.1} parent=1 // loop_exit
      _
    %1010 = vsyncpa [#allocation4], 1
    %s1011 = scalar_lea.sflag [#allocation4], 1
    %1012 = vsyncpa %s1011, 1

</llo_original>
